<compile_context>
chip_gen: v7x
topology: tpu7x:2x2x1
jax: 0.10.0
libtpu: 0.0.40
codegen_flags: <defaults>
</compile_context>

<pallas_src>
import functools

import jax
import jax.numpy as jnp
from jax.experimental import pallas as pl
from jax.experimental.pallas import tpu as pltpu


_GATHER_CHUNK = 8  # rows per wait/compute chunk (sublane-aligned)


def _embeddings_kernel(ids_ref, tok_hbm, pos_ref, out_ref, rows, sems,
                       *, chunk_rows):
    # ids_ref: (B*T,) int32, SMEM (scalar prefetch) -- flattened token ids
    # tok_hbm: (V, D) float32, HBM (pl.ANY)         -- full token table (manual DMA)
    # pos_ref: (TM, D) float32, VMEM                -- position rows for this tile
    # out_ref: (1, TM, D) float32, VMEM             -- output tile
    # rows:    (TM, D) float32, VMEM scratch        -- gather landing buffer
    # sems:    (n_chunks,) DMA semaphores           -- one shared sem per row chunk
    t = pl.program_id(0)
    b = pl.program_id(1)
    TM = rows.shape[0]
    C = chunk_rows
    n_chunks = TM // C
    base = (b * pl.num_programs(0) + t) * TM  # flat row offset of this tile

    # Issue ALL row-gather DMAs up front so the DMA engine overlaps them.
    # The C copies of a chunk share one semaphore (static Python unroll;
    # TM is a compile-time int).
    copies = []
    for c in range(n_chunks):
        for i in range(C):
            r = c * C + i
            row_id = ids_ref[base + r]  # scalar read from SMEM
            cp = pltpu.make_async_copy(
                tok_hbm.at[pl.ds(row_id, 1), :],  # (1, D) vocab row in HBM
                rows.at[pl.ds(r, 1), :],          # (1, D) slot in VMEM buffer
                sems.at[c],
            )
            cp.start()
            copies.append(cp)

    # Wait / add / store chunk-by-chunk: the VPU add + lane-dense store of
    # chunk c overlaps with still-in-flight gathers of chunks > c.
    for c in range(n_chunks):
        for i in range(C):
            copies[c * C + i].wait()
        sl = pl.ds(c * C, C)
        out_ref[0, sl, :] = (rows[sl, :] + pos_ref[sl, :]).astype(out_ref.dtype)


def _pick_row_tile(T, cap=256):
    """Largest row tile (multiple of 8, <= cap) that divides T."""
    for tm in (256, 128, 64, 32, 16, 8):
        if tm <= cap and T % tm == 0:
            return tm
    return T  # fallback: whole sequence as one tile (block == full dim)


@functools.partial(jax.jit, static_argnames=("row_tile",))
def embeddings_forward(x_ids, tok_table, pos_table, *, row_tile=256):
    """x_ids: (B, T) int; tok_table: (V, D) f32; pos_table: (P, D) f32 -> (B, T, D) f32."""
    B, T = x_ids.shape
    V, D = tok_table.shape
    P, Dp = pos_table.shape
    assert D == Dp, "embedding dims must match"
    assert T <= P, "sequence length exceeds max_position_embeddings"

    TM = _pick_row_tile(T, row_tile)
    if TM % _GATHER_CHUNK == 0 and TM >= _GATHER_CHUNK:
        chunk_rows = _GATHER_CHUNK
    else:
        chunk_rows = TM
    n_chunks = TM // chunk_rows

    # Clamp ids so an out-of-range token cannot trigger an OOB DMA
    # (PyTorch would raise; we clamp -- see header note).
    ids_flat = jnp.clip(x_ids.reshape(-1).astype(jnp.int32), 0, V - 1)

    grid = (T // TM, B)  # sequence axis outer -> position tile reused across batch
    kernel = functools.partial(_embeddings_kernel, chunk_rows=chunk_rows)

    out = pl.pallas_call(
        kernel,
        out_shape=jax.ShapeDtypeStruct((B, T, D), tok_table.dtype),
        grid_spec=pltpu.PrefetchScalarGridSpec(
            num_scalar_prefetch=1,            # ids_flat -> SMEM
            grid=grid,
            in_specs=[
                # Full vocab table stays in HBM; rows gathered manually by DMA.
                pl.BlockSpec(memory_space=pl.ANY),
                # Position rows [t*TM, (t+1)*TM) of the position table.
                pl.BlockSpec((TM, D), lambda t, b, ids: (t, 0)),
            ],
            out_specs=pl.BlockSpec((1, TM, D), lambda t, b, ids: (b, t, 0)),
            scratch_shapes=[
                pltpu.VMEM((TM, D), tok_table.dtype),
                pltpu.SemaphoreType.DMA((n_chunks,)),
            ],
        ),
        compiler_params=pltpu.CompilerParams(
            dimension_semantics=("parallel", "parallel")),
    )(ids_flat, tok_table, pos_table)
    return out


if __name__ == "__main__":
    # Small synthetic config (BabyJoeyConfig stand-in)
    vocab_size = 64
    n_embd = 128
    max_position_embeddings = 16
    batch = 2
    seq = 8

    key = jax.random.PRNGKey(0)
    k_ids, k_tok, k_pos = jax.random.split(key, 3)

    # Deterministic parameter init (nn.Embedding default: N(0, 1))
    tok_table = jax.random.normal(k_tok, (vocab_size, n_embd), dtype=jnp.float32)
    pos_table = jax.random.normal(k_pos, (max_position_embeddings, n_embd),
                                  dtype=jnp.float32)

    # Deterministic example input token ids
    x_ids = jax.random.randint(k_ids, (batch, seq), 0, vocab_size, dtype=jnp.int32)

    out = embeddings_forward(x_ids, tok_table, pos_table)
    out = jax.block_until_ready(out)

    # Reference check (plain JAX gather + add)
    ref = jnp.take(tok_table, x_ids, axis=0) + pos_table[:seq][None, :, :]
    assert out.shape == (batch, seq, n_embd)
    assert jnp.allclose(out, ref, atol=1e-6, rtol=1e-6)

    print("KERNEL_OK")
</pallas_src>

<mosaic_0001>
module attributes {stable_mosaic.version = 11 : i64} {
  func.func @_embeddings_kernel(%arg0: i32, %arg1: i32, %arg2: memref<16xi32, #tpu.memory_space<smem>>, %arg3: memref<64x128xf32, #tpu.memory_space<any>>, %arg4: memref<8x128xf32, #tpu.memory_space<vmem>>, %arg5: memref<1x8x128xf32, #tpu.memory_space<vmem>>, %arg6: memref<8x128xf32, #tpu.memory_space<vmem>>, %arg7: memref<1x!tpu.dma_semaphore, #tpu.memory_space<semaphore_mem>>) attributes {dimension_semantics = [#tpu.dimension_semantics<parallel>, #tpu.dimension_semantics<parallel>], iteration_bounds = array<i64: 1, 2>, scalar_prefetch = 1 : i64, scratch_operands = 2 : i64, tpu.core_type = #tpu.core_type<tc>, window_params = [{}, {transform_indices = @transform_1, window_bounds = array<i64: 8, 128>}, {transform_indices = @transform_2, window_bounds = array<i64: 1, 8, 128>}]} {
    %c1_i32 = arith.constant 1 : i32
    %0 = arith.muli %arg1, %c1_i32 : i32
    %1 = arith.addi %0, %arg0 : i32
    %c8_i32 = arith.constant 8 : i32
    %2 = arith.muli %1, %c8_i32 : i32
    %c0_i32 = arith.constant 0 : i32
    %3 = arith.addi %2, %c0_i32 : i32
    %4 = arith.index_cast %3 : i32 to index
    %5 = memref.load %arg2[%4] : memref<16xi32, #tpu.memory_space<smem>>
    %c0_i32_0 = arith.constant 0 : i32
    %c0_i32_1 = arith.constant 0 : i32
    %6 = tpu.memref_slice %arg3[%5, %c0_i32_1] : memref<64x128xf32, #tpu.memory_space<any>> -> memref<1x128xf32, #tpu.memory_space<any>>
    %c0_i32_2 = arith.constant 0 : i32
    %c0_i32_3 = arith.constant 0 : i32
    %7 = tpu.memref_slice %arg6[%c0_i32_2, %c0_i32_3] : memref<8x128xf32, #tpu.memory_space<vmem>> -> memref<1x128xf32, #tpu.memory_space<vmem>>
    %8 = tpu.memref_slice %arg7[%c0_i32_0] : memref<1x!tpu.dma_semaphore, #tpu.memory_space<semaphore_mem>> -> memref<1x!tpu.dma_semaphore, #tpu.memory_space<semaphore_mem>>
    %9 = tpu.memref_squeeze %8 : memref<1x!tpu.dma_semaphore, #tpu.memory_space<semaphore_mem>> -> memref<!tpu.dma_semaphore, #tpu.memory_space<semaphore_mem>>
    tpu.enqueue_dma source(%6 : memref<1x128xf32, #tpu.memory_space<any>>) target(%7 : memref<1x128xf32, #tpu.memory_space<vmem>>) target_semaphore(%9 : memref<!tpu.dma_semaphore, #tpu.memory_space<semaphore_mem>>)
    %c1_i32_4 = arith.constant 1 : i32
    %10 = arith.addi %2, %c1_i32_4 : i32
    %11 = arith.index_cast %10 : i32 to index
    %12 = memref.load %arg2[%11] : memref<16xi32, #tpu.memory_space<smem>>
    %c0_i32_5 = arith.constant 0 : i32
    %c0_i32_6 = arith.constant 0 : i32
    %13 = tpu.memref_slice %arg3[%12, %c0_i32_6] : memref<64x128xf32, #tpu.memory_space<any>> -> memref<1x128xf32, #tpu.memory_space<any>>
    %c1_i32_7 = arith.constant 1 : i32
    %c0_i32_8 = arith.constant 0 : i32
    %14 = tpu.memref_slice %arg6[%c1_i32_7, %c0_i32_8] : memref<8x128xf32, #tpu.memory_space<vmem>> -> memref<1x128xf32, #tpu.memory_space<vmem>>
    %15 = tpu.memref_slice %arg7[%c0_i32_5] : memref<1x!tpu.dma_semaphore, #tpu.memory_space<semaphore_mem>> -> memref<1x!tpu.dma_semaphore, #tpu.memory_space<semaphore_mem>>
    %16 = tpu.memref_squeeze %15 : memref<1x!tpu.dma_semaphore, #tpu.memory_space<semaphore_mem>> -> memref<!tpu.dma_semaphore, #tpu.memory_space<semaphore_mem>>
    tpu.enqueue_dma source(%13 : memref<1x128xf32, #tpu.memory_space<any>>) target(%14 : memref<1x128xf32, #tpu.memory_space<vmem>>) target_semaphore(%16 : memref<!tpu.dma_semaphore, #tpu.memory_space<semaphore_mem>>)
    %c2_i32 = arith.constant 2 : i32
    %17 = arith.addi %2, %c2_i32 : i32
    %18 = arith.index_cast %17 : i32 to index
    %19 = memref.load %arg2[%18] : memref<16xi32, #tpu.memory_space<smem>>
    %c0_i32_9 = arith.constant 0 : i32
    %c0_i32_10 = arith.constant 0 : i32
    %20 = tpu.memref_slice %arg3[%19, %c0_i32_10] : memref<64x128xf32, #tpu.memory_space<any>> -> memref<1x128xf32, #tpu.memory_space<any>>
    %c2_i32_11 = arith.constant 2 : i32
    %c0_i32_12 = arith.constant 0 : i32
    %21 = tpu.memref_slice %arg6[%c2_i32_11, %c0_i32_12] : memref<8x128xf32, #tpu.memory_space<vmem>> -> memref<1x128xf32, #tpu.memory_space<vmem>>
    %22 = tpu.memref_slice %arg7[%c0_i32_9] : memref<1x!tpu.dma_semaphore, #tpu.memory_space<semaphore_mem>> -> memref<1x!tpu.dma_semaphore, #tpu.memory_space<semaphore_mem>>
    %23 = tpu.memref_squeeze %22 : memref<1x!tpu.dma_semaphore, #tpu.memory_space<semaphore_mem>> -> memref<!tpu.dma_semaphore, #tpu.memory_space<semaphore_mem>>
    tpu.enqueue_dma source(%20 : memref<1x128xf32, #tpu.memory_space<any>>) target(%21 : memref<1x128xf32, #tpu.memory_space<vmem>>) target_semaphore(%23 : memref<!tpu.dma_semaphore, #tpu.memory_space<semaphore_mem>>)
    %c3_i32 = arith.constant 3 : i32
    %24 = arith.addi %2, %c3_i32 : i32
    %25 = arith.index_cast %24 : i32 to index
    %26 = memref.load %arg2[%25] : memref<16xi32, #tpu.memory_space<smem>>
    %c0_i32_13 = arith.constant 0 : i32
    %c0_i32_14 = arith.constant 0 : i32
    %27 = tpu.memref_slice %arg3[%26, %c0_i32_14] : memref<64x128xf32, #tpu.memory_space<any>> -> memref<1x128xf32, #tpu.memory_space<any>>
    %c3_i32_15 = arith.constant 3 : i32
    %c0_i32_16 = arith.constant 0 : i32
    %28 = tpu.memref_slice %arg6[%c3_i32_15, %c0_i32_16] : memref<8x128xf32, #tpu.memory_space<vmem>> -> memref<1x128xf32, #tpu.memory_space<vmem>>
    %29 = tpu.memref_slice %arg7[%c0_i32_13] : memref<1x!tpu.dma_semaphore, #tpu.memory_space<semaphore_mem>> -> memref<1x!tpu.dma_semaphore, #tpu.memory_space<semaphore_mem>>
    %30 = tpu.memref_squeeze %29 : memref<1x!tpu.dma_semaphore, #tpu.memory_space<semaphore_mem>> -> memref<!tpu.dma_semaphore, #tpu.memory_space<semaphore_mem>>
    tpu.enqueue_dma source(%27 : memref<1x128xf32, #tpu.memory_space<any>>) target(%28 : memref<1x128xf32, #tpu.memory_space<vmem>>) target_semaphore(%30 : memref<!tpu.dma_semaphore, #tpu.memory_space<semaphore_mem>>)
    %c4_i32 = arith.constant 4 : i32
    %31 = arith.addi %2, %c4_i32 : i32
    %32 = arith.index_cast %31 : i32 to index
    %33 = memref.load %arg2[%32] : memref<16xi32, #tpu.memory_space<smem>>
    %c0_i32_17 = arith.constant 0 : i32
    %c0_i32_18 = arith.constant 0 : i32
    %34 = tpu.memref_slice %arg3[%33, %c0_i32_18] : memref<64x128xf32, #tpu.memory_space<any>> -> memref<1x128xf32, #tpu.memory_space<any>>
    %c4_i32_19 = arith.constant 4 : i32
    %c0_i32_20 = arith.constant 0 : i32
    %35 = tpu.memref_slice %arg6[%c4_i32_19, %c0_i32_20] : memref<8x128xf32, #tpu.memory_space<vmem>> -> memref<1x128xf32, #tpu.memory_space<vmem>>
    %36 = tpu.memref_slice %arg7[%c0_i32_17] : memref<1x!tpu.dma_semaphore, #tpu.memory_space<semaphore_mem>> -> memref<1x!tpu.dma_semaphore, #tpu.memory_space<semaphore_mem>>
    %37 = tpu.memref_squeeze %36 : memref<1x!tpu.dma_semaphore, #tpu.memory_space<semaphore_mem>> -> memref<!tpu.dma_semaphore, #tpu.memory_space<semaphore_mem>>
    tpu.enqueue_dma source(%34 : memref<1x128xf32, #tpu.memory_space<any>>) target(%35 : memref<1x128xf32, #tpu.memory_space<vmem>>) target_semaphore(%37 : memref<!tpu.dma_semaphore, #tpu.memory_space<semaphore_mem>>)
    %c5_i32 = arith.constant 5 : i32
    %38 = arith.addi %2, %c5_i32 : i32
    %39 = arith.index_cast %38 : i32 to index
    %40 = memref.load %arg2[%39] : memref<16xi32, #tpu.memory_space<smem>>
    %c0_i32_21 = arith.constant 0 : i32
    %c0_i32_22 = arith.constant 0 : i32
    %41 = tpu.memref_slice %arg3[%40, %c0_i32_22] : memref<64x128xf32, #tpu.memory_space<any>> -> memref<1x128xf32, #tpu.memory_space<any>>
    %c5_i32_23 = arith.constant 5 : i32
    %c0_i32_24 = arith.constant 0 : i32
    %42 = tpu.memref_slice %arg6[%c5_i32_23, %c0_i32_24] : memref<8x128xf32, #tpu.memory_space<vmem>> -> memref<1x128xf32, #tpu.memory_space<vmem>>
    %43 = tpu.memref_slice %arg7[%c0_i32_21] : memref<1x!tpu.dma_semaphore, #tpu.memory_space<semaphore_mem>> -> memref<1x!tpu.dma_semaphore, #tpu.memory_space<semaphore_mem>>
    %44 = tpu.memref_squeeze %43 : memref<1x!tpu.dma_semaphore, #tpu.memory_space<semaphore_mem>> -> memref<!tpu.dma_semaphore, #tpu.memory_space<semaphore_mem>>
    tpu.enqueue_dma source(%41 : memref<1x128xf32, #tpu.memory_space<any>>) target(%42 : memref<1x128xf32, #tpu.memory_space<vmem>>) target_semaphore(%44 : memref<!tpu.dma_semaphore, #tpu.memory_space<semaphore_mem>>)
    %c6_i32 = arith.constant 6 : i32
    %45 = arith.addi %2, %c6_i32 : i32
    %46 = arith.index_cast %45 : i32 to index
    %47 = memref.load %arg2[%46] : memref<16xi32, #tpu.memory_space<smem>>
    %c0_i32_25 = arith.constant 0 : i32
    %c0_i32_26 = arith.constant 0 : i32
    %48 = tpu.memref_slice %arg3[%47, %c0_i32_26] : memref<64x128xf32, #tpu.memory_space<any>> -> memref<1x128xf32, #tpu.memory_space<any>>
    %c6_i32_27 = arith.constant 6 : i32
    %c0_i32_28 = arith.constant 0 : i32
    %49 = tpu.memref_slice %arg6[%c6_i32_27, %c0_i32_28] : memref<8x128xf32, #tpu.memory_space<vmem>> -> memref<1x128xf32, #tpu.memory_space<vmem>>
    %50 = tpu.memref_slice %arg7[%c0_i32_25] : memref<1x!tpu.dma_semaphore, #tpu.memory_space<semaphore_mem>> -> memref<1x!tpu.dma_semaphore, #tpu.memory_space<semaphore_mem>>
    %51 = tpu.memref_squeeze %50 : memref<1x!tpu.dma_semaphore, #tpu.memory_space<semaphore_mem>> -> memref<!tpu.dma_semaphore, #tpu.memory_space<semaphore_mem>>
    tpu.enqueue_dma source(%48 : memref<1x128xf32, #tpu.memory_space<any>>) target(%49 : memref<1x128xf32, #tpu.memory_space<vmem>>) target_semaphore(%51 : memref<!tpu.dma_semaphore, #tpu.memory_space<semaphore_mem>>)
    %c7_i32 = arith.constant 7 : i32
    %52 = arith.addi %2, %c7_i32 : i32
    %53 = arith.index_cast %52 : i32 to index
    %54 = memref.load %arg2[%53] : memref<16xi32, #tpu.memory_space<smem>>
    %c0_i32_29 = arith.constant 0 : i32
    %c0_i32_30 = arith.constant 0 : i32
    %55 = tpu.memref_slice %arg3[%54, %c0_i32_30] : memref<64x128xf32, #tpu.memory_space<any>> -> memref<1x128xf32, #tpu.memory_space<any>>
    %c7_i32_31 = arith.constant 7 : i32
    %c0_i32_32 = arith.constant 0 : i32
    %56 = tpu.memref_slice %arg6[%c7_i32_31, %c0_i32_32] : memref<8x128xf32, #tpu.memory_space<vmem>> -> memref<1x128xf32, #tpu.memory_space<vmem>>
    %57 = tpu.memref_slice %arg7[%c0_i32_29] : memref<1x!tpu.dma_semaphore, #tpu.memory_space<semaphore_mem>> -> memref<1x!tpu.dma_semaphore, #tpu.memory_space<semaphore_mem>>
    %58 = tpu.memref_squeeze %57 : memref<1x!tpu.dma_semaphore, #tpu.memory_space<semaphore_mem>> -> memref<!tpu.dma_semaphore, #tpu.memory_space<semaphore_mem>>
    tpu.enqueue_dma source(%55 : memref<1x128xf32, #tpu.memory_space<any>>) target(%56 : memref<1x128xf32, #tpu.memory_space<vmem>>) target_semaphore(%58 : memref<!tpu.dma_semaphore, #tpu.memory_space<semaphore_mem>>)
    %c0_i32_33 = arith.constant 0 : i32
    %c0_i32_34 = arith.constant 0 : i32
    %59 = tpu.memref_slice %arg3[%5, %c0_i32_34] : memref<64x128xf32, #tpu.memory_space<any>> -> memref<1x128xf32, #tpu.memory_space<any>>
    %c0_i32_35 = arith.constant 0 : i32
    %c0_i32_36 = arith.constant 0 : i32
    %60 = tpu.memref_slice %arg6[%c0_i32_35, %c0_i32_36] : memref<8x128xf32, #tpu.memory_space<vmem>> -> memref<1x128xf32, #tpu.memory_space<vmem>>
    %61 = tpu.memref_slice %arg7[%c0_i32_33] : memref<1x!tpu.dma_semaphore, #tpu.memory_space<semaphore_mem>> -> memref<1x!tpu.dma_semaphore, #tpu.memory_space<semaphore_mem>>
    %62 = tpu.memref_squeeze %61 : memref<1x!tpu.dma_semaphore, #tpu.memory_space<semaphore_mem>> -> memref<!tpu.dma_semaphore, #tpu.memory_space<semaphore_mem>>
    tpu.wait_dma2 semaphore(%62 : memref<!tpu.dma_semaphore, #tpu.memory_space<semaphore_mem>>) src(%59 : memref<1x128xf32, #tpu.memory_space<any>>) dst(%60 : memref<1x128xf32, #tpu.memory_space<vmem>>)
    %c0_i32_37 = arith.constant 0 : i32
    %c0_i32_38 = arith.constant 0 : i32
    %63 = tpu.memref_slice %arg3[%12, %c0_i32_38] : memref<64x128xf32, #tpu.memory_space<any>> -> memref<1x128xf32, #tpu.memory_space<any>>
    %c1_i32_39 = arith.constant 1 : i32
    %c0_i32_40 = arith.constant 0 : i32
    %64 = tpu.memref_slice %arg6[%c1_i32_39, %c0_i32_40] : memref<8x128xf32, #tpu.memory_space<vmem>> -> memref<1x128xf32, #tpu.memory_space<vmem>>
    %65 = tpu.memref_slice %arg7[%c0_i32_37] : memref<1x!tpu.dma_semaphore, #tpu.memory_space<semaphore_mem>> -> memref<1x!tpu.dma_semaphore, #tpu.memory_space<semaphore_mem>>
    %66 = tpu.memref_squeeze %65 : memref<1x!tpu.dma_semaphore, #tpu.memory_space<semaphore_mem>> -> memref<!tpu.dma_semaphore, #tpu.memory_space<semaphore_mem>>
    tpu.wait_dma2 semaphore(%66 : memref<!tpu.dma_semaphore, #tpu.memory_space<semaphore_mem>>) src(%63 : memref<1x128xf32, #tpu.memory_space<any>>) dst(%64 : memref<1x128xf32, #tpu.memory_space<vmem>>)
    %c0_i32_41 = arith.constant 0 : i32
    %c0_i32_42 = arith.constant 0 : i32
    %67 = tpu.memref_slice %arg3[%19, %c0_i32_42] : memref<64x128xf32, #tpu.memory_space<any>> -> memref<1x128xf32, #tpu.memory_space<any>>
    %c2_i32_43 = arith.constant 2 : i32
    %c0_i32_44 = arith.constant 0 : i32
    %68 = tpu.memref_slice %arg6[%c2_i32_43, %c0_i32_44] : memref<8x128xf32, #tpu.memory_space<vmem>> -> memref<1x128xf32, #tpu.memory_space<vmem>>
    %69 = tpu.memref_slice %arg7[%c0_i32_41] : memref<1x!tpu.dma_semaphore, #tpu.memory_space<semaphore_mem>> -> memref<1x!tpu.dma_semaphore, #tpu.memory_space<semaphore_mem>>
    %70 = tpu.memref_squeeze %69 : memref<1x!tpu.dma_semaphore, #tpu.memory_space<semaphore_mem>> -> memref<!tpu.dma_semaphore, #tpu.memory_space<semaphore_mem>>
    tpu.wait_dma2 semaphore(%70 : memref<!tpu.dma_semaphore, #tpu.memory_space<semaphore_mem>>) src(%67 : memref<1x128xf32, #tpu.memory_space<any>>) dst(%68 : memref<1x128xf32, #tpu.memory_space<vmem>>)
    %c0_i32_45 = arith.constant 0 : i32
    %c0_i32_46 = arith.constant 0 : i32
    %71 = tpu.memref_slice %arg3[%26, %c0_i32_46] : memref<64x128xf32, #tpu.memory_space<any>> -> memref<1x128xf32, #tpu.memory_space<any>>
    %c3_i32_47 = arith.constant 3 : i32
    %c0_i32_48 = arith.constant 0 : i32
    %72 = tpu.memref_slice %arg6[%c3_i32_47, %c0_i32_48] : memref<8x128xf32, #tpu.memory_space<vmem>> -> memref<1x128xf32, #tpu.memory_space<vmem>>
    %73 = tpu.memref_slice %arg7[%c0_i32_45] : memref<1x!tpu.dma_semaphore, #tpu.memory_space<semaphore_mem>> -> memref<1x!tpu.dma_semaphore, #tpu.memory_space<semaphore_mem>>
    %74 = tpu.memref_squeeze %73 : memref<1x!tpu.dma_semaphore, #tpu.memory_space<semaphore_mem>> -> memref<!tpu.dma_semaphore, #tpu.memory_space<semaphore_mem>>
    tpu.wait_dma2 semaphore(%74 : memref<!tpu.dma_semaphore, #tpu.memory_space<semaphore_mem>>) src(%71 : memref<1x128xf32, #tpu.memory_space<any>>) dst(%72 : memref<1x128xf32, #tpu.memory_space<vmem>>)
    %c0_i32_49 = arith.constant 0 : i32
    %c0_i32_50 = arith.constant 0 : i32
    %75 = tpu.memref_slice %arg3[%33, %c0_i32_50] : memref<64x128xf32, #tpu.memory_space<any>> -> memref<1x128xf32, #tpu.memory_space<any>>
    %c4_i32_51 = arith.constant 4 : i32
    %c0_i32_52 = arith.constant 0 : i32
    %76 = tpu.memref_slice %arg6[%c4_i32_51, %c0_i32_52] : memref<8x128xf32, #tpu.memory_space<vmem>> -> memref<1x128xf32, #tpu.memory_space<vmem>>
    %77 = tpu.memref_slice %arg7[%c0_i32_49] : memref<1x!tpu.dma_semaphore, #tpu.memory_space<semaphore_mem>> -> memref<1x!tpu.dma_semaphore, #tpu.memory_space<semaphore_mem>>
    %78 = tpu.memref_squeeze %77 : memref<1x!tpu.dma_semaphore, #tpu.memory_space<semaphore_mem>> -> memref<!tpu.dma_semaphore, #tpu.memory_space<semaphore_mem>>
    tpu.wait_dma2 semaphore(%78 : memref<!tpu.dma_semaphore, #tpu.memory_space<semaphore_mem>>) src(%75 : memref<1x128xf32, #tpu.memory_space<any>>) dst(%76 : memref<1x128xf32, #tpu.memory_space<vmem>>)
    %c0_i32_53 = arith.constant 0 : i32
    %c0_i32_54 = arith.constant 0 : i32
    %79 = tpu.memref_slice %arg3[%40, %c0_i32_54] : memref<64x128xf32, #tpu.memory_space<any>> -> memref<1x128xf32, #tpu.memory_space<any>>
    %c5_i32_55 = arith.constant 5 : i32
    %c0_i32_56 = arith.constant 0 : i32
    %80 = tpu.memref_slice %arg6[%c5_i32_55, %c0_i32_56] : memref<8x128xf32, #tpu.memory_space<vmem>> -> memref<1x128xf32, #tpu.memory_space<vmem>>
    %81 = tpu.memref_slice %arg7[%c0_i32_53] : memref<1x!tpu.dma_semaphore, #tpu.memory_space<semaphore_mem>> -> memref<1x!tpu.dma_semaphore, #tpu.memory_space<semaphore_mem>>
    %82 = tpu.memref_squeeze %81 : memref<1x!tpu.dma_semaphore, #tpu.memory_space<semaphore_mem>> -> memref<!tpu.dma_semaphore, #tpu.memory_space<semaphore_mem>>
    tpu.wait_dma2 semaphore(%82 : memref<!tpu.dma_semaphore, #tpu.memory_space<semaphore_mem>>) src(%79 : memref<1x128xf32, #tpu.memory_space<any>>) dst(%80 : memref<1x128xf32, #tpu.memory_space<vmem>>)
    %c0_i32_57 = arith.constant 0 : i32
    %c0_i32_58 = arith.constant 0 : i32
    %83 = tpu.memref_slice %arg3[%47, %c0_i32_58] : memref<64x128xf32, #tpu.memory_space<any>> -> memref<1x128xf32, #tpu.memory_space<any>>
    %c6_i32_59 = arith.constant 6 : i32
    %c0_i32_60 = arith.constant 0 : i32
    %84 = tpu.memref_slice %arg6[%c6_i32_59, %c0_i32_60] : memref<8x128xf32, #tpu.memory_space<vmem>> -> memref<1x128xf32, #tpu.memory_space<vmem>>
    %85 = tpu.memref_slice %arg7[%c0_i32_57] : memref<1x!tpu.dma_semaphore, #tpu.memory_space<semaphore_mem>> -> memref<1x!tpu.dma_semaphore, #tpu.memory_space<semaphore_mem>>
    %86 = tpu.memref_squeeze %85 : memref<1x!tpu.dma_semaphore, #tpu.memory_space<semaphore_mem>> -> memref<!tpu.dma_semaphore, #tpu.memory_space<semaphore_mem>>
    tpu.wait_dma2 semaphore(%86 : memref<!tpu.dma_semaphore, #tpu.memory_space<semaphore_mem>>) src(%83 : memref<1x128xf32, #tpu.memory_space<any>>) dst(%84 : memref<1x128xf32, #tpu.memory_space<vmem>>)
    %c0_i32_61 = arith.constant 0 : i32
    %c0_i32_62 = arith.constant 0 : i32
    %87 = tpu.memref_slice %arg3[%54, %c0_i32_62] : memref<64x128xf32, #tpu.memory_space<any>> -> memref<1x128xf32, #tpu.memory_space<any>>
    %c7_i32_63 = arith.constant 7 : i32
    %c0_i32_64 = arith.constant 0 : i32
    %88 = tpu.memref_slice %arg6[%c7_i32_63, %c0_i32_64] : memref<8x128xf32, #tpu.memory_space<vmem>> -> memref<1x128xf32, #tpu.memory_space<vmem>>
    %89 = tpu.memref_slice %arg7[%c0_i32_61] : memref<1x!tpu.dma_semaphore, #tpu.memory_space<semaphore_mem>> -> memref<1x!tpu.dma_semaphore, #tpu.memory_space<semaphore_mem>>
    %90 = tpu.memref_squeeze %89 : memref<1x!tpu.dma_semaphore, #tpu.memory_space<semaphore_mem>> -> memref<!tpu.dma_semaphore, #tpu.memory_space<semaphore_mem>>
    tpu.wait_dma2 semaphore(%90 : memref<!tpu.dma_semaphore, #tpu.memory_space<semaphore_mem>>) src(%87 : memref<1x128xf32, #tpu.memory_space<any>>) dst(%88 : memref<1x128xf32, #tpu.memory_space<vmem>>)
    %c0 = arith.constant 0 : index
    %c0_65 = arith.constant 0 : index
    %91 = vector.load %arg6[%c0, %c0_65] : memref<8x128xf32, #tpu.memory_space<vmem>>, vector<8x128xf32>
    %c0_66 = arith.constant 0 : index
    %c0_67 = arith.constant 0 : index
    %92 = vector.load %arg4[%c0_66, %c0_67] : memref<8x128xf32, #tpu.memory_space<vmem>>, vector<8x128xf32>
    %93 = arith.addf %91, %92 : vector<8x128xf32>
    %c0_68 = arith.constant 0 : index
    %c0_69 = arith.constant 0 : index
    %c0_70 = arith.constant 0 : index
    %94 = vector.load %arg5[%c0_68, %c0_69, %c0_70] : memref<1x8x128xf32, #tpu.memory_space<vmem>>, vector<1x8x128xf32>
    %95 = vector.shape_cast %94 : vector<1x8x128xf32> to vector<8x128xf32>
    %96 = vector.shape_cast %93 : vector<8x128xf32> to vector<1x8x128xf32>
    tpu.vector_store %arg5[%c0_68, %c0_69, %c0_70], %96 {strides = array<i32>} : memref<1x8x128xf32, #tpu.memory_space<vmem>>, vector<1x8x128xf32>,
    return
  }
  func.func @transform_1(%arg0: i32, %arg1: i32, %arg2: memref<16xi32, #tpu.memory_space<smem>>) -> (i32, i32) {
    %c0_i32 = arith.constant 0 : i32
    %c0_i32_0 = arith.constant 0 : i32
    return %arg0, %c0_i32 : i32, i32
  }
  func.func @transform_2(%arg0: i32, %arg1: i32, %arg2: memref<16xi32, #tpu.memory_space<smem>>) -> (i32, i32, i32) {
    %c0_i32 = arith.constant 0 : i32
    %c0_i32_0 = arith.constant 0 : i32
    return %arg1, %arg0, %c0_i32 : i32, i32, i32
  }
}

</mosaic_0001>

<llo_original>
// kernel: embeddings_forward.1
$region0: #{embeddings_forward.1}
  #allocation0 [shape = 'u32[]', space=smem, size = 0x4, offset = 0x4, fixed_abs, tag = 'smem constant byte address 0x4 - core index']
  #allocation1 [shape = 'u32[144,128]{1,0:T(1,128)}', space=vmem, size = 0x12000, scoped, tag = 'internal scratch']
  #allocation2 [shape = 'f32[8,128]{1,0:T(8,128)}', space=vmem, size = 0x1000, scoped, tag = 'scratch operand']
  #allocation3 [shape = 's32[1]{0}', space=sflag, size = 0x4, scoped, tag = 'scratch operand']
  #allocation4 [shape = 's32[1]{0}', space=sflag, size = 0x4, scoped, tag = 'scoped memory for embeddings_forward.1']
  #allocation5 [shape = 'u8[512]{0}', space=smem, size = 0x200, scoped, tag = 'prefetched SMEM operand 0']
  #allocation10 [shape = 's32[]', space=sflag, size = 0x4, offset = 0, fixed_abs, tag = 'sflag constant byte address 0x0 - dummy sync flag']
  #allocation11 [shape = 's32[]', space=sflag, size = 0x4, offset = 0, fixed_abs, tag = 'sflag constant byte address 0x0 - dummy sync flag']
  #allocation12 [shape = 'u32[]', space=smem, size = 0x4, offset = 0x44, fixed_abs, tag = 'smem constant byte address 0x44 - assertion arg 0']
  #allocation13 [shape = 'u32[]', space=smem, size = 0x4, offset = 0x48, fixed_abs, tag = 'smem constant byte address 0x48 - assertion arg 1']
  #allocation14 [shape = 's32[]', space=sflag, size = 0x4, offset = 0, fixed_abs, tag = 'sflag constant byte address 0x0 - dummy sync flag']
  #allocation15 [shape = 's32[]', space=sflag, size = 0x4, offset = 0, fixed_abs, tag = 'sflag constant byte address 0x0 - dummy sync flag']
  #allocation16 [shape = 's32[]', space=sflag, size = 0x4, offset = 0, fixed_abs, tag = 'sflag constant byte address 0x0 - dummy sync flag']
  #allocation17 [shape = 's32[]', space=sflag, size = 0x4, offset = 0, fixed_abs, tag = 'sflag constant byte address 0x0 - dummy sync flag']
  #allocation18 [shape = 's32[]', space=sflag, size = 0x4, offset = 0, fixed_abs, tag = 'sflag constant byte address 0x0 - dummy sync flag']
  #allocation19 [shape = 's32[]', space=sflag, size = 0x4, offset = 0, fixed_abs, tag = 'sflag constant byte address 0x0 - dummy sync flag']
  #allocation20 [shape = 's32[]', space=sflag, size = 0x4, offset = 0, fixed_abs, tag = 'sflag constant byte address 0x0 - dummy sync flag']
  #allocation21 [shape = 's32[]', space=sflag, size = 0x4, offset = 0, fixed_abs, tag = 'sflag constant byte address 0x0 - dummy sync flag']
  #allocation22 [shape = 's32[]', space=sflag, size = 0x4, offset = 0, fixed_abs, tag = 'sflag constant byte address 0x0 - dummy sync flag']
  #allocation23 [shape = 's32[]', space=sflag, size = 0x4, offset = 0, fixed_abs, tag = 'sflag constant byte address 0x0 - dummy sync flag']
  #allocation24 [shape = 's32[]', space=sflag, size = 0x4, offset = 0, fixed_abs, tag = 'sflag constant byte address 0x0 - dummy sync flag']
  #allocation25 [shape = 's32[]', space=sflag, size = 0x4, offset = 0, fixed_abs, tag = 'sflag constant byte address 0x0 - dummy sync flag']
  #allocation26 [shape = 's32[]', space=sflag, size = 0x4, offset = 0, fixed_abs, tag = 'sflag constant byte address 0x0 - dummy sync flag']
  #allocation27 [shape = 's32[]', space=sflag, size = 0x4, offset = 0, fixed_abs, tag = 'sflag constant byte address 0x0 - dummy sync flag']
  %s0 = inlined_call_operand.vmem [shape: s32[16], index: 0, kind: input, shape index: {}]
  %s1 = inlined_call_operand.hbm [shape: f32[64,128], index: 1, kind: input, shape index: {}]
  %s2 = inlined_call_operand.hbm [shape: f32[16,128], index: 2, kind: input, shape index: {}]
  %s3 = inlined_call_operand.hbm [shape: f32[2,8,128], index: 3, kind: output, shape index: {}]
  %s4 = sld [smem:[#allocation0]]
  $region73: #{embeddings_forward.1} parent=0
    _
  %s6 = ssub.s32 1, %s4
  %s7 = scalar_select 0, %s6, %s4
  %s8 = sshll.u32 %s0, 4
  %s9 = int_to_ptr.vmem [resolvable:$true] %s8
  %11 = dma.vmem_to_smem %s9, 16, [#allocation5], [#allocation4]
  %12 = dma.done [#allocation4], 16
  %13 = sfence
  $region1: #{embeddings_forward.1} parent=0
    #allocation6 [shape = 'u8[4096]{0}', space=vmem, size = 0x1000, scoped, tag = 'input window, operand 2, single buffered']
    #allocation7 [shape = 's32[2]{0}', space=sflag, size = 0x8, scoped, tag = 'scoped memory for embeddings_forward.1']
    #allocation8 [shape = 's32[2]{0}', space=sflag, size = 0x8, scoped, tag = 'scoped memory for embeddings_forward.1']
    #allocation9 [shape = 'u8[8192]{0}', space=vmem, size = 0x2000, scoped, tag = 'output window, operand 0']
    %14 = vsyncpa [#allocation7], 0
    %15 = vsyncpa [#allocation8], 0
    %s16 = scalar_lea.sflag [#allocation8], 1
    %17 = vsyncpa %s16, 0
    loop: start=0, step=1, limit=4
    $region2: #{embeddings_forward.1} parent=1 // loop_pre_header
      _
    $region3: #{embeddings_forward.1} parent=1 // loop_header
      %s19 = sphi 0, %s23
      %p20 = scmp.ge.s32.totalorder %s19, 4
      %s26 = sphi 0, %s38
      %s27 = sphi 0, %s34
      %s28 = sphi 0, %s26
      %s29 = sphi 0, %s27
      %s30 = sphi 0, %s28
      %s31 = sphi 0, %s29
      %s41 = sphi 0, %s43
      %s44 = sphi 0, %s41
      %s45 = sphi 0, %s44
      %s61 = sphi 0, %s45
      %s69 = sphi 0, %s71
      %s72 = sphi 0, %s69
      %s73 = sphi 0, %s72
      %s89 = sphi 0, %s73
    $region4: #{embeddings_forward.1} parent=1 // loop_header_branch
      %22 = sbr.rel (%p20) target = $region8
    $region5: #{embeddings_forward.1} parent=1 // loop_body
      %s24 = ssub.s32 %s19, 1
      %s25 = ssub.s32 %s19, 2
      %s32 = sadd.s32 1, %s27
      %p33 = scmp.ge.s32.totalorder %s32, 2
      %s34 = scalar_select %p33, 0, %s32
      %s35 = sadd.s32 1, %s26
      %s36 = scalar_select %p33, %s35, %s26
      %p37 = scmp.ge.s32.totalorder %s36, 1
      %s38 = scalar_select %p37, 0, %s36
      %s39 = ssub.s32 %s26, %s38
      %p40 = scmp.eq.s32.totalorder %s39, 0
      %s42 = sadd.s32 %s41, 1
      %s43 = scalar_select %p40, %s41, %s42
      %p46 = pneg %p40
      %p47 = scmp.eq.s32.totalorder %s19, 1
      %p48 = por %p46, %p47
      %p49 = scmp.ne.s32.totalorder %s41, %s44
      %p50 = scmp.eq.s32.totalorder %s19, 0
      %p51 = por %p49, %p50
      %p52 = scmp.ne.s32.totalorder %s41, %s44
      %p53 = scmp.eq.s32.totalorder %s24, 1
      %p54 = por %p52, %p53
      %p55 = scmp.ne.s32.totalorder %s44, %s45
      %p56 = scmp.eq.s32.totalorder %s24, 0
      %p57 = por %p55, %p56
      %p58 = scmp.ne.s32.totalorder %s44, %s45
      %p59 = scmp.eq.s32.totalorder %s25, 1
      %p60 = por %p58, %p59
      %p62 = scmp.ne.s32.totalorder %s45, %s61
      %p63 = scmp.eq.s32.totalorder %s25, 0
      %p64 = por %p62, %p63
      %s65 = ssub.s32 %s27, %s34
      %s66 = ssub.s32 %s26, %s38
      %s67 = sor.u32 %s65, %s66
      %p68 = scmp.eq.s32.totalorder %s67, 0
      %s70 = sadd.s32 %s69, 1
      %s71 = scalar_select %p68, %s69, %s70
      %p74 = pneg %p68
      %p75 = scmp.eq.s32.totalorder %s19, 1
      %p76 = por %p74, %p75
      %p77 = scmp.ne.s32.totalorder %s69, %s72
      %p78 = scmp.eq.s32.totalorder %s19, 0
      %p79 = por %p77, %p78
      %p80 = scmp.ne.s32.totalorder %s69, %s72
      %p81 = scmp.eq.s32.totalorder %s24, 1
      %p82 = por %p80, %p81
      %p83 = scmp.ne.s32.totalorder %s72, %s73
      %p84 = scmp.eq.s32.totalorder %s24, 0
      %p85 = por %p83, %p84
      %p86 = scmp.ne.s32.totalorder %s72, %s73
      %p87 = scmp.eq.s32.totalorder %s25, 1
      %p88 = por %p86, %p87
      %p90 = scmp.ne.s32.totalorder %s73, %s89
      %p91 = scmp.eq.s32.totalorder %s25, 0
      %p92 = por %p90, %p91
      %p93 = scmp.le.s32.totalorder 1, %s19
      %p94 = scmp.lt.s32.totalorder %s19, 3
      %p95 = pnand %p93, %p94
      %p96 = pneg %p95
      // Predicated region
      $region9: #{embeddings_forward.1} parent=5 // pred_check
        _
      $region10: #{embeddings_forward.1} parent=5 // pred_check_branch
        %98 = sbr.rel (%p95) target = $region12
      $region11: #{embeddings_forward.1} parent=5 // pred_region
        %s99 = ssub.s32 %s19, 1
        // Predicated region
        $region13: #{embeddings_forward.1} parent=11 // pred_check
          %p100 = pneg %p57
        $region14: #{embeddings_forward.1} parent=11 // pred_check_branch
          %102 = sbr.rel (%p100) target = $region16
        $region15: #{embeddings_forward.1} parent=11 // pred_region
          %s104 = ssub.s32 128, 128
          %105 = vsyncadd [#allocation7], %s104
          %s106 = smul.addr %s28, 128
          %s107 = scalar_lea.hbm %s2, %s106
          %s109 = sshll.u32 [#allocation6], 4
          %s110 = int_to_ptr.vmem [resolvable:$true] %s109
          %112 = dma.hbm_to_vmem [thread:$0]  %s107, 128, %s110, [#allocation7]
        $region16: #{embeddings_forward.1} parent=11 // pred_fallthru
          _
      $region12: #{embeddings_forward.1} parent=5 // pred_fallthru
        _
      %p113 = scmp.lt.s32.totalorder %s19, 2
      // Predicated region
      $region17: #{embeddings_forward.1} parent=5 // pred_check
        %p114 = pneg %p113
      $region18: #{embeddings_forward.1} parent=5 // pred_check_branch
        %116 = sbr.rel (%p114) target = $region20
      $region19: #{embeddings_forward.1} parent=5 // pred_region
        _
      $region20: #{embeddings_forward.1} parent=5 // pred_fallthru
        _
      %p117 = scmp.le.s32.totalorder 1, %s19
      %p118 = scmp.lt.s32.totalorder %s19, 3
      %p119 = pnand %p117, %p118
      %p120 = pneg %p119
      // Predicated region
      $region21: #{embeddings_forward.1} parent=5 // pred_check
        _
      $region22: #{embeddings_forward.1} parent=5 // pred_check_branch
        %122 = sbr.rel (%p119) target = $region24
      $region23: #{embeddings_forward.1} parent=5 // pred_region
        %s123 = ssub.s32 %s19, 1
        // Predicated region
        $region25: #{embeddings_forward.1} parent=23 // pred_check
          %p124 = pneg %p57
        $region26: #{embeddings_forward.1} parent=23 // pred_check_branch
          %126 = sbr.rel (%p124) target = $region28
        $region27: #{embeddings_forward.1} parent=23 // pred_region
          %127 = dma.done [#allocation7], 128
        $region28: #{embeddings_forward.1} parent=23 // pred_fallthru
          _
        %p128 = pneg %p57
        %p129 = pneg %p54
        %p130 = pneg %p85
        %p131 = pneg %p82
        %s132 = sand.u32 %s72, 1
        %s133 = scalar_lea.sflag [#allocation8], %s132
        %s134 = sand.u32 %s72, 1
        %s135 = smul.addr %s134, 8
        %s136 = scalar_lea.vmem [#allocation9], %s135
        %s137 = sadd.s32 %s29, %s28
        %s138 = smul.u32 %s137, 8
        %s139 = sld [smem:[#allocation5 + %s138]]
        %s140 = smul.addr %s139, 16
        %s141 = scalar_lea.hbm %s1, %s140
        // Predicated region
        $region29: #{embeddings_forward.1} parent=23 // pred_check
          _
        $region30: #{embeddings_forward.1} parent=23 // pred_check_branch
          %143 = sbr.rel target = $region32
        $region31: #{embeddings_forward.1} parent=23 // pred_region
          %144 = sst [smem:[#allocation12]] [#allocation11]
          %145 = sst [smem:[#allocation13]] [#allocation10]
        $region32: #{embeddings_forward.1} parent=23 // pred_fallthru
          _
        %147 = shalt.err (0)
        %s149 = sshll.u32 [#allocation2], 4
        %s150 = int_to_ptr.vmem [resolvable:$true] %s149
        %152 = dma.hbm_to_vmem [thread:$0]  %s141, 16, %s150, [#allocation3]
        %s153 = sadd.s32 %s138, 1
        %s154 = sld [smem:[#allocation5 + %s153]]
        %s155 = smul.addr %s154, 16
        %s156 = scalar_lea.hbm %s1, %s155
        %s157 = scalar_lea.vmem [#allocation2], 1
        // Predicated region
        $region33: #{embeddings_forward.1} parent=23 // pred_check
          _
        $region34: #{embeddings_forward.1} parent=23 // pred_check_branch
          %159 = sbr.rel target = $region36
        $region35: #{embeddings_forward.1} parent=23 // pred_region
          %160 = sst [smem:[#allocation12]] [#allocation15]
          %161 = sst [smem:[#allocation13]] [#allocation14]
        $region36: #{embeddings_forward.1} parent=23 // pred_fallthru
          _
        %163 = shalt.err (0)
        %s165 = sshll.u32 %s157, 4
        %s166 = int_to_ptr.vmem [resolvable:$true] %s165
        %168 = dma.hbm_to_vmem [thread:$0]  %s156, 16, %s166, [#allocation3]
        %s169 = sadd.s32 %s138, 2
        %s170 = sld [smem:[#allocation5 + %s169]]
        %s171 = smul.addr %s170, 16
        %s172 = scalar_lea.hbm %s1, %s171
        %s173 = scalar_lea.vmem [#allocation2], 2
        // Predicated region
        $region37: #{embeddings_forward.1} parent=23 // pred_check
          _
        $region38: #{embeddings_forward.1} parent=23 // pred_check_branch
          %175 = sbr.rel target = $region40
        $region39: #{embeddings_forward.1} parent=23 // pred_region
          %176 = sst [smem:[#allocation12]] [#allocation17]
          %177 = sst [smem:[#allocation13]] [#allocation16]
        $region40: #{embeddings_forward.1} parent=23 // pred_fallthru
          _
        %179 = shalt.err (0)
        %s181 = sshll.u32 %s173, 4
        %s182 = int_to_ptr.vmem [resolvable:$true] %s181
        %184 = dma.hbm_to_vmem [thread:$0]  %s172, 16, %s182, [#allocation3]
        %s185 = sadd.s32 %s138, 3
        %s186 = sld [smem:[#allocation5 + %s185]]
        %s187 = smul.addr %s186, 16
        %s188 = scalar_lea.hbm %s1, %s187
        %s189 = scalar_lea.vmem [#allocation2], 3
        // Predicated region
        $region41: #{embeddings_forward.1} parent=23 // pred_check
          _
        $region42: #{embeddings_forward.1} parent=23 // pred_check_branch
          %191 = sbr.rel target = $region44
        $region43: #{embeddings_forward.1} parent=23 // pred_region
          %192 = sst [smem:[#allocation12]] [#allocation19]
          %193 = sst [smem:[#allocation13]] [#allocation18]
        $region44: #{embeddings_forward.1} parent=23 // pred_fallthru
          _
        %195 = shalt.err (0)
        %s197 = sshll.u32 %s189, 4
        %s198 = int_to_ptr.vmem [resolvable:$true] %s197
        %200 = dma.hbm_to_vmem [thread:$0]  %s188, 16, %s198, [#allocation3]
        %s201 = sadd.s32 %s138, 4
        %s202 = sld [smem:[#allocation5 + %s201]]
        %s203 = smul.addr %s202, 16
        %s204 = scalar_lea.hbm %s1, %s203
        %s205 = scalar_lea.vmem [#allocation2], 4
        // Predicated region
        $region45: #{embeddings_forward.1} parent=23 // pred_check
          _
        $region46: #{embeddings_forward.1} parent=23 // pred_check_branch
          %207 = sbr.rel target = $region48
        $region47: #{embeddings_forward.1} parent=23 // pred_region
          %208 = sst [smem:[#allocation12]] [#allocation21]
          %209 = sst [smem:[#allocation13]] [#allocation20]
        $region48: #{embeddings_forward.1} parent=23 // pred_fallthru
          _
        %211 = shalt.err (0)
        %s213 = sshll.u32 %s205, 4
        %s214 = int_to_ptr.vmem [resolvable:$true] %s213
        %216 = dma.hbm_to_vmem [thread:$0]  %s204, 16, %s214, [#allocation3]
        %s217 = sadd.s32 %s138, 5
        %s218 = sld [smem:[#allocation5 + %s217]]
        %s219 = smul.addr %s218, 16
        %s220 = scalar_lea.hbm %s1, %s219
        %s221 = scalar_lea.vmem [#allocation2], 5
        // Predicated region
        $region49: #{embeddings_forward.1} parent=23 // pred_check
          _
        $region50: #{embeddings_forward.1} parent=23 // pred_check_branch
          %223 = sbr.rel target = $region52
        $region51: #{embeddings_forward.1} parent=23 // pred_region
          %224 = sst [smem:[#allocation12]] [#allocation23]
          %225 = sst [smem:[#allocation13]] [#allocation22]
        $region52: #{embeddings_forward.1} parent=23 // pred_fallthru
          _
        %227 = shalt.err (0)
        %s229 = sshll.u32 %s221, 4
        %s230 = int_to_ptr.vmem [resolvable:$true] %s229
        %232 = dma.hbm_to_vmem [thread:$0]  %s220, 16, %s230, [#allocation3]
        %s233 = sadd.s32 %s138, 6
        %s234 = sld [smem:[#allocation5 + %s233]]
        %s235 = smul.addr %s234, 16
        %s236 = scalar_lea.hbm %s1, %s235
        %s237 = scalar_lea.vmem [#allocation2], 6
        // Predicated region
        $region53: #{embeddings_forward.1} parent=23 // pred_check
          _
        $region54: #{embeddings_forward.1} parent=23 // pred_check_branch
          %239 = sbr.rel target = $region56
        $region55: #{embeddings_forward.1} parent=23 // pred_region
          %240 = sst [smem:[#allocation12]] [#allocation25]
          %241 = sst [smem:[#allocation13]] [#allocation24]
        $region56: #{embeddings_forward.1} parent=23 // pred_fallthru
          _
        %243 = shalt.err (0)
        %s245 = sshll.u32 %s237, 4
        %s246 = int_to_ptr.vmem [resolvable:$true] %s245
        %248 = dma.hbm_to_vmem [thread:$0]  %s236, 16, %s246, [#allocation3]
        %s249 = sadd.s32 %s138, 7
        %s250 = sld [smem:[#allocation5 + %s249]]
        %s251 = smul.addr %s250, 16
        %s252 = scalar_lea.hbm %s1, %s251
        %s253 = scalar_lea.vmem [#allocation2], 7
        // Predicated region
        $region57: #{embeddings_forward.1} parent=23 // pred_check
          _
        $region58: #{embeddings_forward.1} parent=23 // pred_check_branch
          %255 = sbr.rel target = $region60
        $region59: #{embeddings_forward.1} parent=23 // pred_region
          %256 = sst [smem:[#allocation12]] [#allocation27]
          %257 = sst [smem:[#allocation13]] [#allocation26]
        $region60: #{embeddings_forward.1} parent=23 // pred_fallthru
          _
        %259 = shalt.err (0)
        %s261 = sshll.u32 %s253, 4
        %s262 = int_to_ptr.vmem [resolvable:$true] %s261
        %264 = dma.hbm_to_vmem [thread:$0]  %s252, 16, %s262, [#allocation3]
        %s265 = smul.u32 1, 1
        %s266 = sshll.u32 %s265, 4
        %267 = dma.done [#allocation3], %s266
        %s268 = sshll.u32 %s265, 4
        %269 = dma.done [#allocation3], %s268
        %s270 = sshll.u32 %s265, 4
        %271 = dma.done [#allocation3], %s270
        %s272 = sshll.u32 %s265, 4
        %273 = dma.done [#allocation3], %s272
        %s274 = sshll.u32 %s265, 4
        %275 = dma.done [#allocation3], %s274
        %s276 = sshll.u32 %s265, 4
        %277 = dma.done [#allocation3], %s276
        %s278 = sshll.u32 %s265, 4
        %279 = dma.done [#allocation3], %s278
        %s280 = sshll.u32 %s265, 4
        %281 = dma.done [#allocation3], %s280
        %v282 = vld [vmem:[#allocation2] sm:$0xff]
        %v283 = vld [vmem:[#allocation6] sm:$0xff]
        %v284 = vadd.f32 %v282, %v283
        %285 = vst [vmem:[%s136] sm:$0xff] %v284
        %s286 = sand.u32 %s72, 1
        %s287 = scalar_lea.sflag [#allocation8], %s286
        %s288 = sand.u32 %s72, 1
        %s289 = smul.addr %s288, 8
        %s290 = scalar_lea.vmem [#allocation9], %s289
        // Predicated region
        $region61: #{embeddings_forward.1} parent=23 // pred_check
          %p291 = pneg %p82
        $region62: #{embeddings_forward.1} parent=23 // pred_check_branch
          %293 = sbr.rel (%p291) target = $region64
        $region63: #{embeddings_forward.1} parent=23 // pred_region
          %s295 = ssub.s32 128, 128
          %296 = vsyncadd %s287, %s295
          %s297 = sadd.s32 %s28, %s29
          %s298 = smul.addr %s297, 128
          %s299 = scalar_lea.hbm %s3, %s298
          %s301 = sshll.u32 %s290, 4
          %s302 = int_to_ptr.vmem [resolvable:$true] %s301
          %304 = dma.vmem_to_hbm [thread:$0]  %s302, 128, %s299, %s287
        $region64: #{embeddings_forward.1} parent=23 // pred_fallthru
          _
      $region24: #{embeddings_forward.1} parent=5 // pred_fallthru
        _
      %p305 = scmp.le.s32.totalorder 2, %s19
      // Predicated region
      $region65: #{embeddings_forward.1} parent=5 // pred_check
        %p306 = pneg %p305
      $region66: #{embeddings_forward.1} parent=5 // pred_check_branch
        %308 = sbr.rel (%p306) target = $region68
      $region67: #{embeddings_forward.1} parent=5 // pred_region
        %s309 = ssub.s32 %s19, 2
        // Predicated region
        $region69: #{embeddings_forward.1} parent=67 // pred_check
          %p310 = pneg %p88
        $region70: #{embeddings_forward.1} parent=67 // pred_check_branch
          %312 = sbr.rel (%p310) target = $region72
        $region71: #{embeddings_forward.1} parent=67 // pred_region
          %s313 = sand.u32 %s73, 1
          %s314 = scalar_lea.sflag [#allocation8], %s313
          %s315 = sand.u32 %s73, 1
          %s316 = smul.addr %s315, 8
          %s317 = scalar_lea.vmem [#allocation9], %s316
          %318 = dma.done %s314, 128
        $region72: #{embeddings_forward.1} parent=67 // pred_fallthru
          _
      $region68: #{embeddings_forward.1} parent=5 // pred_fallthru
        _
    $region6: #{embeddings_forward.1} parent=1 // loop_footer
      %s23 = sadd.s32 1, %s19
    $region7: #{embeddings_forward.1} parent=1 // loop_footer_branch
      %18 = sbr.rel target = $region3
    $region8: #{embeddings_forward.1} parent=1 // loop_exit
      _
    %319 = vsyncpa [#allocation7], 1
    %s320 = scalar_lea.sflag [#allocation7], 1
    %321 = vsyncpa %s320, 1
    %322 = vsyncpa [#allocation8], 1
    %s323 = scalar_lea.sflag [#allocation8], 1
    %324 = vsyncpa %s323, 1
  %325 = vsyncmov [#allocation3]
  %s326 = vpop.sfrf %325
  %p327 = scmp.eq.s32.totalorder %s326, 0
  %p328 = pneg %p327
  %330 = shalt.err (%p328)

</llo_original>
